<compile_context>
chip_gen: v7x
topology: tpu7x:2x2x1
jax: 0.10.0
libtpu: 0.0.40
codegen_flags: <defaults>
</compile_context>

<pallas_src>
import functools

import jax
import jax.numpy as jnp
import numpy as np
from jax.experimental import pallas as pl
from jax.experimental.pallas import tpu as pltpu

_LANE = 128
_SUBLANE = 8


def _droppath_kernel(scale_ref, x_ref, o_ref):
    # scale_ref: (B,) f32 in SMEM -- per-sample 0.0 or 1/keep_prob.
    # x_ref / o_ref: (1, TILE_ROWS, 128) tile of one sample's features.
    b = pl.program_id(0)
    s = scale_ref[b].astype(o_ref.dtype)      # multiply in the input dtype
    o_ref[...] = x_ref[...] * s


def _round_up(n, m):
    return ((n + m - 1) // m) * m


@functools.partial(jax.jit, static_argnames=("keep_prob",))
def _drop_path_device(x, key, keep_prob):
    B = x.shape[0]
    N = int(np.prod(x.shape[1:]))

    # Per-sample keep/drop scale: floor(keep_prob + U[0,1)) / keep_prob.
    u = jax.random.uniform(key, (B,), dtype=jnp.float32)
    scale = jnp.floor(keep_prob + u) * (1.0 / keep_prob)      # (B,) in {0, 1/kp}

    # Pack features into lane-dense (rows, 128) per sample.
    itemsize = jnp.dtype(x.dtype).itemsize
    # ~2 MiB per tile -> double-buffered in+out resident footprint ~8 MiB.
    max_tile_rows = max(
        _SUBLANE, ((2 << 20) // (_LANE * itemsize)) // _SUBLANE * _SUBLANE
    )
    rows = pl.cdiv(N, _LANE)
    tile_rows = min(_round_up(rows, _SUBLANE), max_tile_rows)
    rows_padded = _round_up(rows, tile_rows)
    n_padded = rows_padded * _LANE

    x2 = x.reshape(B, N)
    if n_padded != N:
        x2 = jnp.pad(x2, ((0, 0), (0, n_padded - N)))
    x3 = x2.reshape(B, rows_padded, _LANE)

    grid = (B, rows_padded // tile_rows)

    tile_bytes = tile_rows * _LANE * itemsize
    # Double-buffered input + output (4 tile buffers) + generous headroom,
    # but never above what v7x can actually provide.
    vmem_limit = int(min(48 << 20, max(16 << 20, 8 * tile_bytes)))

    out3 = pl.pallas_call(
        _droppath_kernel,
        out_shape=jax.ShapeDtypeStruct((B, rows_padded, _LANE), x.dtype),
        grid=grid,
        in_specs=[
            pl.BlockSpec(memory_space=pltpu.MemorySpace.SMEM),            # (B,) scale
            pl.BlockSpec((1, tile_rows, _LANE), lambda b, j: (b, j, 0)),  # x tile
        ],
        out_specs=pl.BlockSpec((1, tile_rows, _LANE), lambda b, j: (b, j, 0)),
        compiler_params=pltpu.CompilerParams(
            dimension_semantics=("parallel", "parallel"),
            vmem_limit_bytes=vmem_limit,
        ),
    )(scale, x3)

    out2 = out3.reshape(B, n_padded)
    if n_padded != N:
        out2 = out2[:, :N]
    return out2.reshape(x.shape)


def drop_path(x, seed, drop_prob=0.1, training=True):
    """JAX/Pallas equivalent of the PyTorch DropPath.forward."""
    if drop_prob == 0.0 or not training:
        return x
    assert 0.0 < drop_prob < 1.0, "drop_prob must be in [0, 1)"
    keep_prob = 1.0 - drop_prob
    key = jax.random.PRNGKey(seed) if isinstance(seed, int) else seed
    return _drop_path_device(x, key, keep_prob)


if __name__ == "__main__":
    key = jax.random.PRNGKey(0)
    # Shapes consistent with a ViT-style 4D activation: (B, C, H, W)
    x = jax.random.normal(key, (2, 4, 16, 16), dtype=jnp.float32)

    drop_prob = 0.1
    y = drop_path(x, seed=42, drop_prob=drop_prob, training=True)
    y = jax.block_until_ready(y)

    # Sanity check: every sample is either exactly dropped (all zeros) or
    # scaled by 1/keep_prob, matching the PyTorch DropPath semantics.
    keep_prob = 1.0 - drop_prob
    xh, yh = np.asarray(x), np.asarray(y)
    for b in range(xh.shape[0]):
        dropped = np.allclose(yh[b], 0.0)
        kept = np.allclose(yh[b], xh[b] / keep_prob, rtol=1e-6, atol=1e-6)
        assert dropped or kept, f"sample {b} is neither dropped nor correctly scaled"

    # eval mode / drop_prob == 0 path returns input unchanged
    y_eval = drop_path(x, seed=42, drop_prob=drop_prob, training=False)
    assert np.allclose(np.asarray(y_eval), xh)

    # Non-multiple-of-128 feature count + B > 8 also work (padding path).
    x_odd = jax.random.normal(jax.random.PRNGKey(1), (9, 3, 7, 5), dtype=jnp.float32)
    y_odd = jax.block_until_ready(drop_path(x_odd, seed=7, drop_prob=drop_prob))
    xo, yo = np.asarray(x_odd), np.asarray(y_odd)
    for b in range(xo.shape[0]):
        assert np.allclose(yo[b], 0.0) or np.allclose(
            yo[b], xo[b] / keep_prob, rtol=1e-6, atol=1e-6
        )

    # bf16 path (scale applied in the input dtype, like PyTorch's x.div(kp)).
    x_bf16 = jax.random.normal(jax.random.PRNGKey(2), (4, 8, 128), dtype=jnp.bfloat16)
    y_bf16 = jax.block_until_ready(drop_path(x_bf16, seed=3, drop_prob=drop_prob))
    assert y_bf16.dtype == jnp.bfloat16 and y_bf16.shape == x_bf16.shape

    print("KERNEL_OK")
</pallas_src>

<mosaic_0001>
module attributes {stable_mosaic.version = 11 : i64} {
  func.func @_droppath_kernel(%arg0: i32, %arg1: i32, %arg2: memref<2xf32, #tpu.memory_space<smem>>, %arg3: memref<1x8x128xf32, #tpu.memory_space<vmem>>, %arg4: memref<1x8x128xf32, #tpu.memory_space<vmem>>) attributes {dimension_semantics = [#tpu.dimension_semantics<parallel>, #tpu.dimension_semantics<parallel>], iteration_bounds = array<i64: 2, 1>, scalar_prefetch = 0 : i64, scratch_operands = 0 : i64, tpu.core_type = #tpu.core_type<tc>, window_params = [{transform_indices = @transform_0, window_bounds = array<i64: 2>}, {transform_indices = @transform_1, window_bounds = array<i64: 1, 8, 128>}, {transform_indices = @transform_2, window_bounds = array<i64: 1, 8, 128>}]} {
    %0 = arith.index_cast %arg0 : i32 to index
    %1 = memref.load %arg2[%0] : memref<2xf32, #tpu.memory_space<smem>>
    %c0 = arith.constant 0 : index
    %c0_0 = arith.constant 0 : index
    %c0_1 = arith.constant 0 : index
    %2 = vector.load %arg3[%c0, %c0_0, %c0_1] : memref<1x8x128xf32, #tpu.memory_space<vmem>>, vector<1x8x128xf32>
    %3 = vector.broadcast %1 : f32 to vector<1x8x128xf32>
    %4 = arith.mulf %2, %3 : vector<1x8x128xf32>
    %c0_2 = arith.constant 0 : index
    %c0_3 = arith.constant 0 : index
    %c0_4 = arith.constant 0 : index
    %5 = vector.load %arg4[%c0_2, %c0_3, %c0_4] : memref<1x8x128xf32, #tpu.memory_space<vmem>>, vector<1x8x128xf32>
    tpu.vector_store %arg4[%c0_2, %c0_3, %c0_4], %4 {strides = array<i32>} : memref<1x8x128xf32, #tpu.memory_space<vmem>>, vector<1x8x128xf32>,
    return
  }
  func.func @transform_0(%arg0: i32, %arg1: i32) -> i32 {
    %c0_i32 = arith.constant 0 : i32
    %c0_i32_0 = arith.constant 0 : i32
    return %c0_i32 : i32
  }
  func.func @transform_1(%arg0: i32, %arg1: i32) -> (i32, i32, i32) {
    %c0_i32 = arith.constant 0 : i32
    %c0_i32_0 = arith.constant 0 : i32
    return %arg0, %arg1, %c0_i32 : i32, i32, i32
  }
  func.func @transform_2(%arg0: i32, %arg1: i32) -> (i32, i32, i32) {
    %c0_i32 = arith.constant 0 : i32
    %c0_i32_0 = arith.constant 0 : i32
    return %arg0, %arg1, %c0_i32 : i32, i32, i32
  }
}

</mosaic_0001>

<llo_original>
// kernel: _drop_path_device.1
$region0: #{_drop_path_device.1}
  #allocation0 [shape = 'u32[]', space=smem, size = 0x4, offset = 0x4, fixed_abs, tag = 'smem constant byte address 0x4 - core index']
  #allocation1 [shape = 'u32[144,128]{1,0:T(1,128)}', space=vmem, size = 0x12000, scoped, tag = 'internal scratch']
  %s0 = inlined_call_operand.vmem [shape: f32[2], index: 0, kind: input, shape index: {}]
  %s1 = inlined_call_operand.vmem [shape: f32[2,8,128], index: 1, kind: input, shape index: {}]
  %s2 = inlined_call_operand.vmem [shape: f32[2,8,128], index: 2, kind: output, shape index: {}]
  %s3 = sld [smem:[#allocation0]]
  $region45: #{_drop_path_device.1} parent=0
    _
  %s5 = ssub.s32 1, %s3
  %s6 = scalar_select 0, %s5, %s3
  $region1: #{_drop_path_device.1} parent=0
    #allocation2 [shape = 'u8[512]{0}', space=smem, size = 0x200, scoped, tag = 'input window, operand 0, single buffered']
    #allocation3 [shape = 's32[2]{0}', space=sflag, size = 0x8, scoped, tag = 'scoped memory for _drop_path_device.1']
    %7 = vsyncpa [#allocation3], 0
    loop: start=0, step=1, limit=4
    $region2: #{_drop_path_device.1} parent=1 // loop_pre_header
      _
    $region3: #{_drop_path_device.1} parent=1 // loop_header
      %s9 = sphi 0, %s13
      %p10 = scmp.ge.s32.totalorder %s9, 4
      %s16 = sphi 0, %s28
      %s17 = sphi 0, %s24
      %s18 = sphi 0, %s16
      %s19 = sphi 0, %s17
      %s20 = sphi 0, %s18
      %s21 = sphi 0, %s19
      %s29 = sphi 0, %s29
      %s31 = sphi 0, %s29
      %s32 = sphi 0, %s31
      %s46 = sphi 0, %s32
      %s54 = sphi 0, %s56
      %s57 = sphi 0, %s54
      %s58 = sphi 0, %s57
      %s74 = sphi 0, %s58
      %s82 = sphi 0, %s84
      %s85 = sphi 0, %s82
      %s86 = sphi 0, %s85
      %s102 = sphi 0, %s86
    $region4: #{_drop_path_device.1} parent=1 // loop_header_branch
      %12 = sbr.rel (%p10) target = $region8
    $region5: #{_drop_path_device.1} parent=1 // loop_body
      %s14 = ssub.s32 %s9, 1
      %s15 = ssub.s32 %s9, 2
      %s22 = sadd.s32 1, %s17
      %p23 = scmp.ge.s32.totalorder %s22, 1
      %s24 = scalar_select %p23, 0, %s22
      %s25 = sadd.s32 1, %s16
      %s26 = scalar_select %p23, %s25, %s16
      %p27 = scmp.ge.s32.totalorder %s26, 2
      %s28 = scalar_select %p27, 0, %s26
      %s30 = sadd.s32 %s29, 1
      %p33 = scmp.eq.s32.totalorder %s9, 1
      %p34 = scmp.ne.s32.totalorder %s29, %s31
      %p35 = scmp.eq.s32.totalorder %s9, 0
      %p36 = por %p34, %p35
      %p37 = scmp.ne.s32.totalorder %s29, %s31
      %p38 = scmp.eq.s32.totalorder %s14, 1
      %p39 = por %p37, %p38
      %p40 = scmp.ne.s32.totalorder %s31, %s32
      %p41 = scmp.eq.s32.totalorder %s14, 0
      %p42 = por %p40, %p41
      %p43 = scmp.ne.s32.totalorder %s31, %s32
      %p44 = scmp.eq.s32.totalorder %s15, 1
      %p45 = por %p43, %p44
      %p47 = scmp.ne.s32.totalorder %s32, %s46
      %p48 = scmp.eq.s32.totalorder %s15, 0
      %p49 = por %p47, %p48
      %s50 = ssub.s32 %s16, %s28
      %s51 = ssub.s32 %s17, %s24
      %s52 = sor.u32 %s50, %s51
      %p53 = scmp.eq.s32.totalorder %s52, 0
      %s55 = sadd.s32 %s54, 1
      %s56 = scalar_select %p53, %s54, %s55
      %p59 = pneg %p53
      %p60 = scmp.eq.s32.totalorder %s9, 1
      %p61 = por %p59, %p60
      %p62 = scmp.ne.s32.totalorder %s54, %s57
      %p63 = scmp.eq.s32.totalorder %s9, 0
      %p64 = por %p62, %p63
      %p65 = scmp.ne.s32.totalorder %s54, %s57
      %p66 = scmp.eq.s32.totalorder %s14, 1
      %p67 = por %p65, %p66
      %p68 = scmp.ne.s32.totalorder %s57, %s58
      %p69 = scmp.eq.s32.totalorder %s14, 0
      %p70 = por %p68, %p69
      %p71 = scmp.ne.s32.totalorder %s57, %s58
      %p72 = scmp.eq.s32.totalorder %s15, 1
      %p73 = por %p71, %p72
      %p75 = scmp.ne.s32.totalorder %s58, %s74
      %p76 = scmp.eq.s32.totalorder %s15, 0
      %p77 = por %p75, %p76
      %s78 = ssub.s32 %s16, %s28
      %s79 = ssub.s32 %s17, %s24
      %s80 = sor.u32 %s78, %s79
      %p81 = scmp.eq.s32.totalorder %s80, 0
      %s83 = sadd.s32 %s82, 1
      %s84 = scalar_select %p81, %s82, %s83
      %p87 = pneg %p81
      %p88 = scmp.eq.s32.totalorder %s9, 1
      %p89 = por %p87, %p88
      %p90 = scmp.ne.s32.totalorder %s82, %s85
      %p91 = scmp.eq.s32.totalorder %s9, 0
      %p92 = por %p90, %p91
      %p93 = scmp.ne.s32.totalorder %s82, %s85
      %p94 = scmp.eq.s32.totalorder %s14, 1
      %p95 = por %p93, %p94
      %p96 = scmp.ne.s32.totalorder %s85, %s86
      %p97 = scmp.eq.s32.totalorder %s14, 0
      %p98 = por %p96, %p97
      %p99 = scmp.ne.s32.totalorder %s85, %s86
      %p100 = scmp.eq.s32.totalorder %s15, 1
      %p101 = por %p99, %p100
      %p103 = scmp.ne.s32.totalorder %s86, %s102
      %p104 = scmp.eq.s32.totalorder %s15, 0
      %p105 = por %p103, %p104
      %p106 = scmp.le.s32.totalorder 1, %s9
      %p107 = scmp.lt.s32.totalorder %s9, 3
      %p108 = pnand %p106, %p107
      %p109 = pneg %p108
      // Predicated region
      $region9: #{_drop_path_device.1} parent=5 // pred_check
        _
      $region10: #{_drop_path_device.1} parent=5 // pred_check_branch
        %111 = sbr.rel (%p108) target = $region12
      $region11: #{_drop_path_device.1} parent=5 // pred_region
        %s112 = ssub.s32 %s9, 1
        // Predicated region
        $region13: #{_drop_path_device.1} parent=11 // pred_check
          %p113 = pneg %p42
        $region14: #{_drop_path_device.1} parent=11 // pred_check_branch
          %115 = sbr.rel (%p113) target = $region16
        $region15: #{_drop_path_device.1} parent=11 // pred_region
          %s117 = ssub.s32 16, 16
          %118 = vsyncadd [#allocation3], %s117
          %s120 = sshll.u32 %s0, 4
          %s121 = int_to_ptr.vmem [resolvable:$true] %s120
          %123 = dma.vmem_to_smem %s121, 16, [#allocation2], [#allocation3]
        $region16: #{_drop_path_device.1} parent=11 // pred_fallthru
          _
      $region12: #{_drop_path_device.1} parent=5 // pred_fallthru
        _
      %p124 = scmp.lt.s32.totalorder %s9, 2
      // Predicated region
      $region17: #{_drop_path_device.1} parent=5 // pred_check
        %p125 = pneg %p124
      $region18: #{_drop_path_device.1} parent=5 // pred_check_branch
        %127 = sbr.rel (%p125) target = $region20
      $region19: #{_drop_path_device.1} parent=5 // pred_region
        // Predicated region
        $region21: #{_drop_path_device.1} parent=19 // pred_check
          %p128 = pneg %p64
        $region22: #{_drop_path_device.1} parent=19 // pred_check_branch
          %130 = sbr.rel (%p128) target = $region24
        $region23: #{_drop_path_device.1} parent=19 // pred_region
          %p131 = scmp.lt.s32.totalorder %s16, 1
          %s132 = scalar_select %p131, %s16, 1
          %p133 = scmp.lt.s32.totalorder %s17, 0
          %s134 = scalar_select %p133, %s17, 0
          %s135 = sadd.s32 %s134, %s132
          %s136 = smul.addr %s135, 8
          %s137 = scalar_lea.vmem %s1, %s136
        $region24: #{_drop_path_device.1} parent=19 // pred_fallthru
          _
      $region20: #{_drop_path_device.1} parent=5 // pred_fallthru
        _
      %p138 = scmp.le.s32.totalorder 1, %s9
      %p139 = scmp.lt.s32.totalorder %s9, 3
      %p140 = pnand %p138, %p139
      %p141 = pneg %p140
      // Predicated region
      $region25: #{_drop_path_device.1} parent=5 // pred_check
        _
      $region26: #{_drop_path_device.1} parent=5 // pred_check_branch
        %143 = sbr.rel (%p140) target = $region28
      $region27: #{_drop_path_device.1} parent=5 // pred_region
        %s144 = ssub.s32 %s9, 1
        // Predicated region
        $region29: #{_drop_path_device.1} parent=27 // pred_check
          %p145 = pneg %p42
        $region30: #{_drop_path_device.1} parent=27 // pred_check_branch
          %147 = sbr.rel (%p145) target = $region32
        $region31: #{_drop_path_device.1} parent=27 // pred_region
          %148 = dma.done [#allocation3], 16
        $region32: #{_drop_path_device.1} parent=27 // pred_fallthru
          _
        %149 = sfence
        %p150 = pneg %p42
        %p151 = pneg %p39
        %p152 = scmp.lt.s32.totalorder %s18, 1
        %s153 = scalar_select %p152, %s18, 1
        %p154 = scmp.lt.s32.totalorder %s19, 0
        %s155 = scalar_select %p154, %s19, 0
        %s156 = sadd.s32 %s155, %s153
        %s157 = smul.addr %s156, 8
        %s158 = scalar_lea.vmem %s1, %s157
        %p159 = pneg %p70
        %p160 = pneg %p67
        %p161 = pneg %p98
        %p162 = pneg %p95
        %p163 = scmp.lt.s32.totalorder %s18, 1
        %s164 = scalar_select %p163, %s18, 1
        %p165 = scmp.lt.s32.totalorder %s19, 0
        %s166 = scalar_select %p165, %s19, 0
        %s167 = sadd.s32 %s166, %s164
        %s168 = smul.addr %s167, 8
        %s169 = scalar_lea.vmem %s2, %s168
        %p170 = scmp.lt.s32.totalorder %s18, 1
        %s171 = scalar_select %p170, %s18, 1
        %p172 = scmp.lt.s32.totalorder %s19, 0
        %s173 = scalar_select %p172, %s19, 0
        %s174 = sadd.s32 %s173, %s171
        %s175 = smul.addr %s174, 8
        %s176 = scalar_lea.vmem %s1, %s175
        %p177 = scmp.lt.s32.totalorder %s18, 1
        %s178 = scalar_select %p177, %s18, 1
        %p179 = scmp.lt.s32.totalorder %s19, 0
        %s180 = scalar_select %p179, %s19, 0
        %s181 = sadd.s32 %s180, %s178
        %s182 = smul.addr %s181, 8
        %s183 = scalar_lea.vmem %s2, %s182
        %s184 = sld [smem:[#allocation2 + %s18]]
        %v185 = vld [vmem:[%s176] sm:$0xff]
        %v186 = vstv %s184
        %v187 = vmul.f32 %v185, %v186
        %188 = vst [vmem:[%s183] sm:$0xff] %v187
        %p189 = scmp.lt.s32.totalorder %s18, 1
        %s190 = scalar_select %p189, %s18, 1
        %p191 = scmp.lt.s32.totalorder %s19, 0
        %s192 = scalar_select %p191, %s19, 0
        %s193 = sadd.s32 %s192, %s190
        %s194 = smul.addr %s193, 8
        %s195 = scalar_lea.vmem %s2, %s194
        // Predicated region
        $region33: #{_drop_path_device.1} parent=27 // pred_check
          %p196 = pneg %p95
        $region34: #{_drop_path_device.1} parent=27 // pred_check_branch
          %198 = sbr.rel (%p196) target = $region36
        $region35: #{_drop_path_device.1} parent=27 // pred_region
          _
        $region36: #{_drop_path_device.1} parent=27 // pred_fallthru
          _
      $region28: #{_drop_path_device.1} parent=5 // pred_fallthru
        _
      %p199 = scmp.le.s32.totalorder 2, %s9
      // Predicated region
      $region37: #{_drop_path_device.1} parent=5 // pred_check
        %p200 = pneg %p199
      $region38: #{_drop_path_device.1} parent=5 // pred_check_branch
        %202 = sbr.rel (%p200) target = $region40
      $region39: #{_drop_path_device.1} parent=5 // pred_region
        %s203 = ssub.s32 %s9, 2
        // Predicated region
        $region41: #{_drop_path_device.1} parent=39 // pred_check
          %p204 = pneg %p101
        $region42: #{_drop_path_device.1} parent=39 // pred_check_branch
          %206 = sbr.rel (%p204) target = $region44
        $region43: #{_drop_path_device.1} parent=39 // pred_region
          %p207 = scmp.lt.s32.totalorder %s20, 1
          %s208 = scalar_select %p207, %s20, 1
          %p209 = scmp.lt.s32.totalorder %s21, 0
          %s210 = scalar_select %p209, %s21, 0
          %s211 = sadd.s32 %s210, %s208
          %s212 = smul.addr %s211, 8
          %s213 = scalar_lea.vmem %s2, %s212
        $region44: #{_drop_path_device.1} parent=39 // pred_fallthru
          _
      $region40: #{_drop_path_device.1} parent=5 // pred_fallthru
        _
    $region6: #{_drop_path_device.1} parent=1 // loop_footer
      %s13 = sadd.s32 1, %s9
    $region7: #{_drop_path_device.1} parent=1 // loop_footer_branch
      %8 = sbr.rel target = $region3
    $region8: #{_drop_path_device.1} parent=1 // loop_exit
      _
    %214 = vsyncpa [#allocation3], 1
    %s215 = scalar_lea.sflag [#allocation3], 1
    %216 = vsyncpa %s215, 1

</llo_original>
